<compile_context>
chip_gen: v6e
topology: v6e:2x2x1
jax: 0.10.0
libtpu: 0.0.40
codegen_flags: <defaults>
</compile_context>

<pallas_src>
import functools

import jax
import jax.numpy as jnp
from jax import lax
from jax.experimental import pallas as pl
from jax.experimental.pallas import tpu as pltpu


def mlp_kernel(x_ref, w1_ref, b1_ref, w2_ref, b2_ref, w3_ref, b3_ref, o_ref,
               *, cast_x_to=None):
    """One batch tile.  All activations keep batch on the lane (last) axis.

    x_ref  : [batch_tile, in_size]   (native layout, f32)
    w1_ref : [hidden, in_size]       (f32 or bf16)     b1_ref: [hidden, 1] f32
    w2_ref : [hidden, hidden]        (f32 or bf16)     b2_ref: [hidden, 1] f32
    w3_ref : [hidden, 1] f32                           b3_ref: [1, 1]      f32
    o_ref  : [1, batch_tile]         (lane-dense output slab, unmasked vst)
    """
    x = x_ref[...]
    if cast_x_to is not None:
        x = x.astype(cast_x_to)   # in-VMEM cast; no extra HBM pass for x

    # fc1 + ReLU: contract the shared `in` axis -> [hidden, batch_tile], f32 acc.
    h1 = lax.dot_general(w1_ref[...], x,
                         dimension_numbers=(((1,), (1,)), ((), ())),
                         preferred_element_type=jnp.float32)
    h1 = jnp.maximum(h1 + b1_ref[...], 0.0)

    # fc2 + ReLU -> [hidden, batch_tile]
    h1 = h1.astype(w2_ref.dtype)  # no-op in f32 mode; bf16 MXU feed otherwise
    h2 = jnp.dot(w2_ref[...], h1, preferred_element_type=jnp.float32)
    h2 = jnp.maximum(h2 + b2_ref[...], 0.0)

    # fc3 (out_features == 1): VPU multiply + sublane reduce instead of an MXU
    # matmul with a 1-lane result.  -> [1, batch_tile]
    y = jnp.sum(h2 * w3_ref[...], axis=0, keepdims=True) + b3_ref[...]
    o_ref[...] = y.astype(o_ref.dtype)


# Conservative per-tile VMEM budget so the same tile choice fits every
# generation (v7x has only 64 MiB per TensorCore); vmem_limit is never pinned
# at exactly the physical cap.
_VMEM_BUDGET = 40 * 1024 * 1024
_VMEM_LIMIT_MAX = 48 * 1024 * 1024


def _tile_vmem_bytes(bt, in_size, hidden, w_itemsize, x_buffers, w_buffers):
    x_bytes = x_buffers * bt * in_size * 4            # x stays f32 in HBM/VMEM
    out_bytes = 2 * bt * 4                            # double-buffered out slab
    w_bytes = w_buffers * (hidden * in_size + hidden * hidden) * w_itemsize
    b_bytes = w_buffers * (3 * hidden + 1) * 4        # biases + w3 column (f32)
    interm = 2 * hidden * bt * 4                      # h1 / h2 f32 live values
    return x_bytes + out_bytes + w_bytes + b_bytes + interm


def _pick_batch_tile(B, in_size, hidden, w_itemsize, x_buffers, w_buffers):
    """Largest lane-friendly tile that (a) divides B, (b) leaves >= 2 grid steps
    when B >= 256 (v7x dual-core sharding), (c) fits the per-tile VMEM budget."""
    for t in (65536, 32768, 16384, 8192, 4096, 2048, 1024, 512, 256, 128):
        if B % t != 0:
            continue
        if B >= 256 and B // t < 2:
            continue
        if _tile_vmem_bytes(t, in_size, hidden, w_itemsize,
                            x_buffers, w_buffers) > _VMEM_BUDGET:
            continue
        return t
    return B   # small / awkward batch: whole batch in one step (block == full dim)


def three_regressor_forward(x, params, *, batch_tile=None, use_bf16_matmul=False,
                            x_buffers=2):
    """Fused 3-layer MLP forward.  x: [B, input_size] (f32).  Returns [B, 1]."""
    w1, b1, w2, b2, w3, b3 = params  # PyTorch layout: W [out, in], b [out]
    B, in_size = x.shape
    hidden = w1.shape[0]
    out_dtype = x.dtype

    w_itemsize = 2 if use_bf16_matmul else 4
    # Constant-index specs are still double-buffered by default; single-buffer
    # them once W2 is big enough to matter for v7x's 64 MiB VMEM.
    w_buffers = 1 if hidden * hidden * w_itemsize > (8 << 20) else 2

    if batch_tile is None:
        batch_tile = _pick_batch_tile(B, in_size, hidden, w_itemsize,
                                      x_buffers, w_buffers)
    assert B % batch_tile == 0, "batch must be divisible by batch_tile"
    grid = (B // batch_tile,)

    # Biases / w3 as column vectors so they broadcast across lanes in-kernel.
    b1c = b1.reshape(hidden, 1).astype(jnp.float32)
    b2c = b2.reshape(hidden, 1).astype(jnp.float32)
    w3c = w3.reshape(hidden, 1).astype(jnp.float32)
    b3c = b3.reshape(1, 1).astype(jnp.float32)

    if use_bf16_matmul:
        # Only the tiny, DMA'd-once weights get cast in the wrapper; x stays f32
        # in HBM (no extra mem-bound pass) and is cast in-VMEM inside the kernel.
        w1m = w1.astype(jnp.bfloat16)
        w2m = w2.astype(jnp.bfloat16)
        cast_x_to = jnp.bfloat16
    else:
        w1m, w2m = w1, w2
        cast_x_to = None

    def w_spec(shape):
        if w_buffers == 1:
            return pl.BlockSpec(shape, lambda i: (0, 0),
                                pipeline_mode=pl.Buffered(1))
        return pl.BlockSpec(shape, lambda i: (0, 0))

    # x in its native [B, in] layout: one contiguous tile DMA per grid step.
    x_kwargs = {} if x_buffers == 2 else {"pipeline_mode": pl.Buffered(x_buffers)}
    x_spec = pl.BlockSpec((batch_tile, in_size), lambda i: (i, 0), **x_kwargs)

    needed = _tile_vmem_bytes(batch_tile, in_size, hidden, w_itemsize,
                              x_buffers, w_buffers)
    if needed > _VMEM_LIMIT_MAX:
        raise ValueError(
            f"batch_tile={batch_tile}, hidden={hidden} needs ~{needed >> 20} MiB "
            f"VMEM (> {_VMEM_LIMIT_MAX >> 20} MiB cap); pick a smaller batch_tile."
        )
        # TODO(synk): for very large `hidden`, K-tile W2 with an f32 accumulator
        # instead of keeping the full weight resident.
    vmem_limit = int(min(_VMEM_LIMIT_MAX, max(2 * needed, 16 * 1024 * 1024)))

    weight_hbm_bytes = ((hidden * in_size + hidden * hidden) * w_itemsize
                        + (3 * hidden + 1) * 4)
    cost = pl.CostEstimate(
        flops=2 * B * (in_size * hidden + hidden * hidden + hidden),
        transcendentals=0,
        bytes_accessed=x.size * x.dtype.itemsize + weight_hbm_bytes + B * 4,
    )

    kernel = functools.partial(mlp_kernel, cast_x_to=cast_x_to)

    out = pl.pallas_call(
        kernel,
        out_shape=jax.ShapeDtypeStruct((1, B), out_dtype),   # lane-dense slab
        grid_spec=pltpu.PrefetchScalarGridSpec(
            num_scalar_prefetch=0,
            grid=grid,
            in_specs=[
                x_spec,                      # x tile [batch_tile, in_size]
                w_spec((hidden, in_size)),   # W1
                w_spec((hidden, 1)),         # b1
                w_spec((hidden, hidden)),    # W2
                w_spec((hidden, 1)),         # b2
                w_spec((hidden, 1)),         # w3 (as a column)
                w_spec((1, 1)),              # b3
            ],
            out_specs=pl.BlockSpec((1, batch_tile), lambda i: (0, i)),
        ),
        compiler_params=pltpu.CompilerParams(
            dimension_semantics=("parallel",),
            vmem_limit_bytes=vmem_limit,
        ),
        cost_estimate=cost,
    )(x, w1m, b1c, w2m, b2c, w3c, b3c)

    return out.reshape(B, 1)


def init_params(key, input_size, hidden_size, dtype=jnp.float32):
    """Deterministic synthetic parameters in PyTorch nn.Linear layout:
    W [out_features, in_features], b [out_features] (uniform fan-in init)."""
    ks = jax.random.split(key, 6)

    def linear(kw, kb, fan_in, fan_out):
        bound = 1.0 / jnp.sqrt(jnp.asarray(fan_in, dtype))
        w = jax.random.uniform(kw, (fan_out, fan_in), dtype, -bound, bound)
        b = jax.random.uniform(kb, (fan_out,), dtype, -bound, bound)
        return w, b

    w1, b1 = linear(ks[0], ks[1], input_size, hidden_size)
    w2, b2 = linear(ks[2], ks[3], hidden_size, hidden_size)
    w3, b3 = linear(ks[4], ks[5], hidden_size, 1)
    return (w1, b1, w2, b2, w3, b3)


if __name__ == "__main__":
    key = jax.random.PRNGKey(0)
    k_x, k_p = jax.random.split(key)

    batch, input_size, hidden_size = 256, 32, 32
    x = jax.random.normal(k_x, (batch, input_size), dtype=jnp.float32)
    params = init_params(k_p, input_size, hidden_size)

    # Reference (same math as the PyTorch module, PyTorch weight layout).
    w1, b1, w2, b2, w3, b3 = params
    ref = jnp.maximum(x @ w1.T + b1, 0.0)
    ref = jnp.maximum(ref @ w2.T + b2, 0.0)
    ref = ref @ w3.T + b3                      # [batch, 1]

    # 1) default: auto tile (128 rows -> grid=2, both v7x cores), f32 MXU.
    out = jax.block_until_ready(three_regressor_forward(x, params))
    assert out.shape == (batch, 1)
    assert jnp.allclose(out, ref, atol=1e-5, rtol=1e-5)

    # 2) explicit single-tile path (whole batch, one lane-dense grid step).
    out2 = jax.block_until_ready(
        three_regressor_forward(x, params, batch_tile=256))
    assert jnp.allclose(out2, ref, atol=1e-5, rtol=1e-5)

    # 3) bf16 MXU weights, x cast in-VMEM, f32 accumulation — loose tolerance.
    out3 = jax.block_until_ready(
        three_regressor_forward(x, params, use_bf16_matmul=True))
    assert jnp.allclose(out3, ref, atol=1e-1, rtol=1e-1)

    print("KERNEL_OK")
</pallas_src>

<mosaic_0001>
module attributes {stable_mosaic.version = 11 : i64} {
  func.func @mlp_kernel(%arg0: i32, %arg1: memref<128x32xf32, #tpu.memory_space<vmem>>, %arg2: memref<32x32xf32, #tpu.memory_space<vmem>>, %arg3: memref<32x1xf32, #tpu.memory_space<vmem>>, %arg4: memref<32x32xf32, #tpu.memory_space<vmem>>, %arg5: memref<32x1xf32, #tpu.memory_space<vmem>>, %arg6: memref<32x1xf32, #tpu.memory_space<vmem>>, %arg7: memref<1x1xf32, #tpu.memory_space<vmem>>, %arg8: memref<1x128xf32, #tpu.memory_space<vmem>>) attributes {dimension_semantics = [#tpu.dimension_semantics<parallel>], iteration_bounds = array<i64: 2>, scalar_prefetch = 0 : i64, scratch_operands = 0 : i64, tpu.core_type = #tpu.core_type<tc>, window_params = [{transform_indices = @transform_0, window_bounds = array<i64: 128, 32>}, {pipeline_mode = #tpu.pipeline_mode<synchronous>, transform_indices = @transform_1, window_bounds = array<i64: 32, 32>}, {pipeline_mode = #tpu.pipeline_mode<synchronous>, transform_indices = @transform_2, window_bounds = array<i64: 32, 1>}, {pipeline_mode = #tpu.pipeline_mode<synchronous>, transform_indices = @transform_3, window_bounds = array<i64: 32, 32>}, {pipeline_mode = #tpu.pipeline_mode<synchronous>, transform_indices = @transform_4, window_bounds = array<i64: 32, 1>}, {pipeline_mode = #tpu.pipeline_mode<synchronous>, transform_indices = @transform_5, window_bounds = array<i64: 32, 1>}, {pipeline_mode = #tpu.pipeline_mode<synchronous>, transform_indices = @transform_6, window_bounds = array<i64: 1, 1>}, {transform_indices = @transform_7, window_bounds = array<i64: 1, 128>}]} {
    %c0 = arith.constant 0 : index
    %c0_0 = arith.constant 0 : index
    %0 = vector.load %arg1[%c0, %c0_0] : memref<128x32xf32, #tpu.memory_space<vmem>>, vector<128x32xf32>
    %c0_1 = arith.constant 0 : index
    %c0_2 = arith.constant 0 : index
    %1 = vector.load %arg2[%c0_1, %c0_2] : memref<32x32xf32, #tpu.memory_space<vmem>>, vector<32x32xf32>
    %cst = arith.constant dense<0.000000e+00> : vector<32x128xf32>
    %2 = tpu.matmul %1, %0, %cst {dimension_numbers = #tpu.dot_dimension_numbers<[1], [1], [0], [0], [0, 0, 1, 0], [], []>} : vector<32x32xf32>, vector<128x32xf32>, vector<32x128xf32> -> vector<32x128xf32>
    %c0_3 = arith.constant 0 : index
    %c0_4 = arith.constant 0 : index
    %3 = vector.load %arg3[%c0_3, %c0_4] : memref<32x1xf32, #tpu.memory_space<vmem>>, vector<32x1xf32>
    %4 = vector.broadcast %3 : vector<32x1xf32> to vector<32x128xf32>
    %5 = arith.addf %2, %4 : vector<32x128xf32>
    %cst_5 = arith.constant 0.000000e+00 : f32
    %6 = vector.broadcast %cst_5 : f32 to vector<32x128xf32>
    %7 = arith.maximumf %5, %6 : vector<32x128xf32>
    %c0_6 = arith.constant 0 : index
    %c0_7 = arith.constant 0 : index
    %8 = vector.load %arg4[%c0_6, %c0_7] : memref<32x32xf32, #tpu.memory_space<vmem>>, vector<32x32xf32>
    %cst_8 = arith.constant dense<0.000000e+00> : vector<32x128xf32>
    %9 = tpu.matmul %8, %7, %cst_8 {dimension_numbers = #tpu.dot_dimension_numbers<[1], [0], [0], [1], [0, 0, 1, 1], [], []>} : vector<32x32xf32>, vector<32x128xf32>, vector<32x128xf32> -> vector<32x128xf32>
    %c0_9 = arith.constant 0 : index
    %c0_10 = arith.constant 0 : index
    %10 = vector.load %arg5[%c0_9, %c0_10] : memref<32x1xf32, #tpu.memory_space<vmem>>, vector<32x1xf32>
    %11 = vector.broadcast %10 : vector<32x1xf32> to vector<32x128xf32>
    %12 = arith.addf %9, %11 : vector<32x128xf32>
    %cst_11 = arith.constant 0.000000e+00 : f32
    %13 = vector.broadcast %cst_11 : f32 to vector<32x128xf32>
    %14 = arith.maximumf %12, %13 : vector<32x128xf32>
    %c0_12 = arith.constant 0 : index
    %c0_13 = arith.constant 0 : index
    %15 = vector.load %arg6[%c0_12, %c0_13] : memref<32x1xf32, #tpu.memory_space<vmem>>, vector<32x1xf32>
    %16 = vector.broadcast %15 : vector<32x1xf32> to vector<32x128xf32>
    %17 = arith.mulf %14, %16 : vector<32x128xf32>
    %cst_14 = arith.constant dense<0.000000e+00> : vector<128xf32>
    %18 = vector.multi_reduction <add>, %17, %cst_14 [0] : vector<32x128xf32> to vector<128xf32>
    %19 = vector.shape_cast %18 : vector<128xf32> to vector<1x128xf32>
    %c0_15 = arith.constant 0 : index
    %c0_16 = arith.constant 0 : index
    %20 = vector.load %arg7[%c0_15, %c0_16] : memref<1x1xf32, #tpu.memory_space<vmem>>, vector<1x1xf32>
    %21 = vector.broadcast %20 : vector<1x1xf32> to vector<1x128xf32>
    %22 = arith.addf %19, %21 : vector<1x128xf32>
    %c0_17 = arith.constant 0 : index
    %c0_18 = arith.constant 0 : index
    %23 = vector.load %arg8[%c0_17, %c0_18] : memref<1x128xf32, #tpu.memory_space<vmem>>, vector<1x128xf32>
    tpu.vector_store %arg8[%c0_17, %c0_18], %22 {strides = array<i32>} : memref<1x128xf32, #tpu.memory_space<vmem>>, vector<1x128xf32>,
    return
  }
  func.func @transform_0(%arg0: i32) -> (i32, i32) {
    %c0_i32 = arith.constant 0 : i32
    %c0_i32_0 = arith.constant 0 : i32
    return %arg0, %c0_i32 : i32, i32
  }
  func.func @transform_1(%arg0: i32) -> (i32, i32) {
    %c0_i32 = arith.constant 0 : i32
    %c0_i32_0 = arith.constant 0 : i32
    %c0_i32_1 = arith.constant 0 : i32
    return %c0_i32, %c0_i32_0 : i32, i32
  }
  func.func @transform_2(%arg0: i32) -> (i32, i32) {
    %c0_i32 = arith.constant 0 : i32
    %c0_i32_0 = arith.constant 0 : i32
    %c0_i32_1 = arith.constant 0 : i32
    return %c0_i32, %c0_i32_0 : i32, i32
  }
  func.func @transform_3(%arg0: i32) -> (i32, i32) {
    %c0_i32 = arith.constant 0 : i32
    %c0_i32_0 = arith.constant 0 : i32
    %c0_i32_1 = arith.constant 0 : i32
    return %c0_i32, %c0_i32_0 : i32, i32
  }
  func.func @transform_4(%arg0: i32) -> (i32, i32) {
    %c0_i32 = arith.constant 0 : i32
    %c0_i32_0 = arith.constant 0 : i32
    %c0_i32_1 = arith.constant 0 : i32
    return %c0_i32, %c0_i32_0 : i32, i32
  }
  func.func @transform_5(%arg0: i32) -> (i32, i32) {
    %c0_i32 = arith.constant 0 : i32
    %c0_i32_0 = arith.constant 0 : i32
    %c0_i32_1 = arith.constant 0 : i32
    return %c0_i32, %c0_i32_0 : i32, i32
  }
  func.func @transform_6(%arg0: i32) -> (i32, i32) {
    %c0_i32 = arith.constant 0 : i32
    %c0_i32_0 = arith.constant 0 : i32
    %c0_i32_1 = arith.constant 0 : i32
    return %c0_i32, %c0_i32_0 : i32, i32
  }
  func.func @transform_7(%arg0: i32) -> (i32, i32) {
    %c0_i32 = arith.constant 0 : i32
    %c0_i32_0 = arith.constant 0 : i32
    return %c0_i32, %arg0 : i32, i32
  }
}

</mosaic_0001>

<llo_original>
// kernel: tpu_custom_call.1
$region0: #{tpu_custom_call.1}
  #allocation0 [shape = 'u32[]', space=smem, size = 0x4, offset = 0x4, fixed_abs, tag = 'smem constant byte address 0x4 - core index']
  #allocation1 [shape = 'u32[144,128]{1,0:T(1,128)}', space=vmem, size = 0x12000, scoped, tag = 'internal scratch']
  #allocation2 [shape = 'f32[1,1]{1,0:T(1,128)S(1)}', space=vmem, size = 0x200, scoped, tag = 'scoped memory for tpu_custom_call.1']
  %s0 = inlined_call_operand.vmem [shape: f32[256,32], index: 0, kind: input, shape index: {}]
  %s1 = inlined_call_operand.vmem [shape: f32[32,32], index: 1, kind: input, shape index: {}]
  %s2 = inlined_call_operand.vmem [shape: f32[32,1], index: 2, kind: input, shape index: {}]
  %s3 = inlined_call_operand.vmem [shape: f32[32,32], index: 3, kind: input, shape index: {}]
  %s4 = inlined_call_operand.vmem [shape: f32[32,1], index: 4, kind: input, shape index: {}]
  %s5 = inlined_call_operand.vmem [shape: f32[32,1], index: 5, kind: input, shape index: {}]
  %s6 = inlined_call_operand.<no memory space> [shape: f32[1,1], index: 6, kind: input, shape index: {}]
  %s7 = inlined_call_operand.hbm [shape: f32[1,256], index: 7, kind: output, shape index: {}]
  %s8 = sld [smem:[#allocation0]]
  $region61: #{tpu_custom_call.1} parent=0
    _
  %s10 = ssub.s32 1, %s8
  %s11 = scalar_select 0, %s10, %s8
  %v12 = vstv %s6
  %13 = vst [vmem:[#allocation2] sm:$0x1] %v12
  $region1: #{tpu_custom_call.1} parent=0
    #allocation3 [shape = 'u8[1024]{0}', space=vmem, size = 0x400, scoped, tag = 'output window, operand 0']
    #allocation4 [shape = 's32[2]{0}', space=sflag, size = 0x8, scoped, tag = 'scoped memory for tpu_custom_call.1']
    %14 = vsyncpa [#allocation4], 0
    %s15 = scalar_lea.sflag [#allocation4], 1
    %16 = vsyncpa %s15, 0
    loop: start=0, step=1, limit=4
    $region2: #{tpu_custom_call.1} parent=1 // loop_pre_header
      _
    $region3: #{tpu_custom_call.1} parent=1 // loop_header
      %s18 = sphi 0, %s22
      %p19 = scmp.ge.s32.totalorder %s18, 4
      %s28 = sphi 0, %s30
      %s31 = sphi 0, %s28
      %s32 = sphi 0, %s31
      %s48 = sphi 0, %s32
      %s52 = sphi 0, %s52
      %s54 = sphi 0, %s52
      %s55 = sphi 0, %s54
      %s69 = sphi 0, %s55
      %s73 = sphi 0, %s73
      %s75 = sphi 0, %s73
      %s76 = sphi 0, %s75
      %s90 = sphi 0, %s76
      %s94 = sphi 0, %s94
      %s96 = sphi 0, %s94
      %s97 = sphi 0, %s96
      %s111 = sphi 0, %s97
      %s115 = sphi 0, %s115
      %s117 = sphi 0, %s115
      %s118 = sphi 0, %s117
      %s132 = sphi 0, %s118
      %s136 = sphi 0, %s136
      %s138 = sphi 0, %s136
      %s139 = sphi 0, %s138
      %s153 = sphi 0, %s139
      %s157 = sphi 0, %s157
      %s159 = sphi 0, %s157
      %s160 = sphi 0, %s159
      %s174 = sphi 0, %s160
      %s180 = sphi 0, %s182
      %s183 = sphi 0, %s180
      %s184 = sphi 0, %s183
      %s200 = sphi 0, %s184
    $region4: #{tpu_custom_call.1} parent=1 // loop_header_branch
      %21 = sbr.rel (%p19) target = $region8
    $region5: #{tpu_custom_call.1} parent=1 // loop_body
      %s23 = ssub.s32 %s18, 1
      %s24 = ssub.s32 %s18, 2
      %s25 = sadd.s32 %s18, 1
      %s26 = ssub.s32 %s18, %s25
      %p27 = scmp.eq.s32.totalorder %s26, 0
      %s29 = sadd.s32 %s28, 1
      %s30 = scalar_select %p27, %s28, %s29
      %p33 = pneg %p27
      %p34 = scmp.eq.s32.totalorder %s18, 1
      %p35 = por %p33, %p34
      %p36 = scmp.ne.s32.totalorder %s28, %s31
      %p37 = scmp.eq.s32.totalorder %s18, 0
      %p38 = por %p36, %p37
      %p39 = scmp.ne.s32.totalorder %s28, %s31
      %p40 = scmp.eq.s32.totalorder %s23, 1
      %p41 = por %p39, %p40
      %p42 = scmp.ne.s32.totalorder %s31, %s32
      %p43 = scmp.eq.s32.totalorder %s23, 0
      %p44 = por %p42, %p43
      %p45 = scmp.ne.s32.totalorder %s31, %s32
      %p46 = scmp.eq.s32.totalorder %s24, 1
      %p47 = por %p45, %p46
      %p49 = scmp.ne.s32.totalorder %s32, %s48
      %p50 = scmp.eq.s32.totalorder %s24, 0
      %p51 = por %p49, %p50
      %s53 = sadd.s32 %s52, 1
      %p56 = scmp.eq.s32.totalorder %s18, 1
      %p57 = scmp.ne.s32.totalorder %s52, %s54
      %p58 = scmp.eq.s32.totalorder %s18, 0
      %p59 = por %p57, %p58
      %p60 = scmp.ne.s32.totalorder %s52, %s54
      %p61 = scmp.eq.s32.totalorder %s23, 1
      %p62 = por %p60, %p61
      %p63 = scmp.ne.s32.totalorder %s54, %s55
      %p64 = scmp.eq.s32.totalorder %s23, 0
      %p65 = por %p63, %p64
      %p66 = scmp.ne.s32.totalorder %s54, %s55
      %p67 = scmp.eq.s32.totalorder %s24, 1
      %p68 = por %p66, %p67
      %p70 = scmp.ne.s32.totalorder %s55, %s69
      %p71 = scmp.eq.s32.totalorder %s24, 0
      %p72 = por %p70, %p71
      %s74 = sadd.s32 %s73, 1
      %p77 = scmp.eq.s32.totalorder %s18, 1
      %p78 = scmp.ne.s32.totalorder %s73, %s75
      %p79 = scmp.eq.s32.totalorder %s18, 0
      %p80 = por %p78, %p79
      %p81 = scmp.ne.s32.totalorder %s73, %s75
      %p82 = scmp.eq.s32.totalorder %s23, 1
      %p83 = por %p81, %p82
      %p84 = scmp.ne.s32.totalorder %s75, %s76
      %p85 = scmp.eq.s32.totalorder %s23, 0
      %p86 = por %p84, %p85
      %p87 = scmp.ne.s32.totalorder %s75, %s76
      %p88 = scmp.eq.s32.totalorder %s24, 1
      %p89 = por %p87, %p88
      %p91 = scmp.ne.s32.totalorder %s76, %s90
      %p92 = scmp.eq.s32.totalorder %s24, 0
      %p93 = por %p91, %p92
      %s95 = sadd.s32 %s94, 1
      %p98 = scmp.eq.s32.totalorder %s18, 1
      %p99 = scmp.ne.s32.totalorder %s94, %s96
      %p100 = scmp.eq.s32.totalorder %s18, 0
      %p101 = por %p99, %p100
      %p102 = scmp.ne.s32.totalorder %s94, %s96
      %p103 = scmp.eq.s32.totalorder %s23, 1
      %p104 = por %p102, %p103
      %p105 = scmp.ne.s32.totalorder %s96, %s97
      %p106 = scmp.eq.s32.totalorder %s23, 0
      %p107 = por %p105, %p106
      %p108 = scmp.ne.s32.totalorder %s96, %s97
      %p109 = scmp.eq.s32.totalorder %s24, 1
      %p110 = por %p108, %p109
      %p112 = scmp.ne.s32.totalorder %s97, %s111
      %p113 = scmp.eq.s32.totalorder %s24, 0
      %p114 = por %p112, %p113
      %s116 = sadd.s32 %s115, 1
      %p119 = scmp.eq.s32.totalorder %s18, 1
      %p120 = scmp.ne.s32.totalorder %s115, %s117
      %p121 = scmp.eq.s32.totalorder %s18, 0
      %p122 = por %p120, %p121
      %p123 = scmp.ne.s32.totalorder %s115, %s117
      %p124 = scmp.eq.s32.totalorder %s23, 1
      %p125 = por %p123, %p124
      %p126 = scmp.ne.s32.totalorder %s117, %s118
      %p127 = scmp.eq.s32.totalorder %s23, 0
      %p128 = por %p126, %p127
      %p129 = scmp.ne.s32.totalorder %s117, %s118
      %p130 = scmp.eq.s32.totalorder %s24, 1
      %p131 = por %p129, %p130
      %p133 = scmp.ne.s32.totalorder %s118, %s132
      %p134 = scmp.eq.s32.totalorder %s24, 0
      %p135 = por %p133, %p134
      %s137 = sadd.s32 %s136, 1
      %p140 = scmp.eq.s32.totalorder %s18, 1
      %p141 = scmp.ne.s32.totalorder %s136, %s138
      %p142 = scmp.eq.s32.totalorder %s18, 0
      %p143 = por %p141, %p142
      %p144 = scmp.ne.s32.totalorder %s136, %s138
      %p145 = scmp.eq.s32.totalorder %s23, 1
      %p146 = por %p144, %p145
      %p147 = scmp.ne.s32.totalorder %s138, %s139
      %p148 = scmp.eq.s32.totalorder %s23, 0
      %p149 = por %p147, %p148
      %p150 = scmp.ne.s32.totalorder %s138, %s139
      %p151 = scmp.eq.s32.totalorder %s24, 1
      %p152 = por %p150, %p151
      %p154 = scmp.ne.s32.totalorder %s139, %s153
      %p155 = scmp.eq.s32.totalorder %s24, 0
      %p156 = por %p154, %p155
      %s158 = sadd.s32 %s157, 1
      %p161 = scmp.eq.s32.totalorder %s18, 1
      %p162 = scmp.ne.s32.totalorder %s157, %s159
      %p163 = scmp.eq.s32.totalorder %s18, 0
      %p164 = por %p162, %p163
      %p165 = scmp.ne.s32.totalorder %s157, %s159
      %p166 = scmp.eq.s32.totalorder %s23, 1
      %p167 = por %p165, %p166
      %p168 = scmp.ne.s32.totalorder %s159, %s160
      %p169 = scmp.eq.s32.totalorder %s23, 0
      %p170 = por %p168, %p169
      %p171 = scmp.ne.s32.totalorder %s159, %s160
      %p172 = scmp.eq.s32.totalorder %s24, 1
      %p173 = por %p171, %p172
      %p175 = scmp.ne.s32.totalorder %s160, %s174
      %p176 = scmp.eq.s32.totalorder %s24, 0
      %p177 = por %p175, %p176
      %s178 = ssub.s32 %s18, %s25
      %p179 = scmp.eq.s32.totalorder %s178, 0
      %s181 = sadd.s32 %s180, 1
      %s182 = scalar_select %p179, %s180, %s181
      %p185 = pneg %p179
      %p186 = scmp.eq.s32.totalorder %s18, 1
      %p187 = por %p185, %p186
      %p188 = scmp.ne.s32.totalorder %s180, %s183
      %p189 = scmp.eq.s32.totalorder %s18, 0
      %p190 = por %p188, %p189
      %p191 = scmp.ne.s32.totalorder %s180, %s183
      %p192 = scmp.eq.s32.totalorder %s23, 1
      %p193 = por %p191, %p192
      %p194 = scmp.ne.s32.totalorder %s183, %s184
      %p195 = scmp.eq.s32.totalorder %s23, 0
      %p196 = por %p194, %p195
      %p197 = scmp.ne.s32.totalorder %s183, %s184
      %p198 = scmp.eq.s32.totalorder %s24, 1
      %p199 = por %p197, %p198
      %p201 = scmp.ne.s32.totalorder %s184, %s200
      %p202 = scmp.eq.s32.totalorder %s24, 0
      %p203 = por %p201, %p202
      %p204 = scmp.le.s32.totalorder 1, %s18
      %p205 = scmp.lt.s32.totalorder %s18, 3
      %p206 = pnand %p204, %p205
      %p207 = pneg %p206
      // Predicated region
      $region9: #{tpu_custom_call.1} parent=5 // pred_check
        _
      $region10: #{tpu_custom_call.1} parent=5 // pred_check_branch
        %209 = sbr.rel (%p206) target = $region12
      $region11: #{tpu_custom_call.1} parent=5 // pred_region
        %s210 = ssub.s32 %s18, 1
        // Predicated region
        $region13: #{tpu_custom_call.1} parent=11 // pred_check
          %p211 = pneg %p65
        $region14: #{tpu_custom_call.1} parent=11 // pred_check_branch
          %213 = sbr.rel (%p211) target = $region16
        $region15: #{tpu_custom_call.1} parent=11 // pred_region
          _
        $region16: #{tpu_custom_call.1} parent=11 // pred_fallthru
          _
        // Predicated region
        $region17: #{tpu_custom_call.1} parent=11 // pred_check
          %p214 = pneg %p86
        $region18: #{tpu_custom_call.1} parent=11 // pred_check_branch
          %216 = sbr.rel (%p214) target = $region20
        $region19: #{tpu_custom_call.1} parent=11 // pred_region
          _
        $region20: #{tpu_custom_call.1} parent=11 // pred_fallthru
          _
        // Predicated region
        $region21: #{tpu_custom_call.1} parent=11 // pred_check
          %p217 = pneg %p107
        $region22: #{tpu_custom_call.1} parent=11 // pred_check_branch
          %219 = sbr.rel (%p217) target = $region24
        $region23: #{tpu_custom_call.1} parent=11 // pred_region
          _
        $region24: #{tpu_custom_call.1} parent=11 // pred_fallthru
          _
        // Predicated region
        $region25: #{tpu_custom_call.1} parent=11 // pred_check
          %p220 = pneg %p128
        $region26: #{tpu_custom_call.1} parent=11 // pred_check_branch
          %222 = sbr.rel (%p220) target = $region28
        $region27: #{tpu_custom_call.1} parent=11 // pred_region
          _
        $region28: #{tpu_custom_call.1} parent=11 // pred_fallthru
          _
        // Predicated region
        $region29: #{tpu_custom_call.1} parent=11 // pred_check
          %p223 = pneg %p149
        $region30: #{tpu_custom_call.1} parent=11 // pred_check_branch
          %225 = sbr.rel (%p223) target = $region32
        $region31: #{tpu_custom_call.1} parent=11 // pred_region
          _
        $region32: #{tpu_custom_call.1} parent=11 // pred_fallthru
          _
        // Predicated region
        $region33: #{tpu_custom_call.1} parent=11 // pred_check
          %p226 = pneg %p170
        $region34: #{tpu_custom_call.1} parent=11 // pred_check_branch
          %228 = sbr.rel (%p226) target = $region36
        $region35: #{tpu_custom_call.1} parent=11 // pred_region
          _
        $region36: #{tpu_custom_call.1} parent=11 // pred_fallthru
          _
      $region12: #{tpu_custom_call.1} parent=5 // pred_fallthru
        _
      %p229 = scmp.lt.s32.totalorder %s18, 2
      // Predicated region
      $region37: #{tpu_custom_call.1} parent=5 // pred_check
        %p230 = pneg %p229
      $region38: #{tpu_custom_call.1} parent=5 // pred_check_branch
        %232 = sbr.rel (%p230) target = $region40
      $region39: #{tpu_custom_call.1} parent=5 // pred_region
        // Predicated region
        $region41: #{tpu_custom_call.1} parent=39 // pred_check
          %p233 = pneg %p38
        $region42: #{tpu_custom_call.1} parent=39 // pred_check_branch
          %235 = sbr.rel (%p233) target = $region44
        $region43: #{tpu_custom_call.1} parent=39 // pred_region
          %s236 = smul.u32 16, %s18
          %p237 = scmp.lt.s32.totalorder %s236, 31
          %s238 = scalar_select %p237, %s236, 31
          %s239 = smul.addr %s238, 8
          %s240 = scalar_lea.vmem %s0, %s239
          %s241 = smul.u32 16, %s18
        $region44: #{tpu_custom_call.1} parent=39 // pred_fallthru
          _
      $region40: #{tpu_custom_call.1} parent=5 // pred_fallthru
        _
      %p242 = scmp.le.s32.totalorder 1, %s18
      %p243 = scmp.lt.s32.totalorder %s18, 3
      %p244 = pnand %p242, %p243
      %p245 = pneg %p244
      // Predicated region
      $region45: #{tpu_custom_call.1} parent=5 // pred_check
        _
      $region46: #{tpu_custom_call.1} parent=5 // pred_check_branch
        %247 = sbr.rel (%p244) target = $region48
      $region47: #{tpu_custom_call.1} parent=5 // pred_region
        %s248 = ssub.s32 %s18, 1
        %s249 = smul.u32 16, %s23
        %p250 = scmp.lt.s32.totalorder %s249, 31
        %s251 = scalar_select %p250, %s249, 31
        %s252 = smul.addr %s251, 8
        %s253 = scalar_lea.vmem %s0, %s252
        %p254 = pneg %p44
        %p255 = pneg %p41
        %p256 = pneg %p65
        %p257 = pneg %p62
        %p258 = pneg %p86
        %p259 = pneg %p83
        %p260 = pneg %p107
        %p261 = pneg %p104
        %p262 = pneg %p128
        %p263 = pneg %p125
        %p264 = pneg %p149
        %p265 = pneg %p146
        %p266 = pneg %p170
        %p267 = pneg %p167
        %p268 = pneg %p196
        %p269 = pneg %p193
        %s270 = sand.u32 %s183, 1
        %s271 = scalar_lea.sflag [#allocation4], %s270
        %s272 = sand.u32 %s183, 1
        %s273 = scalar_lea.vmem [#allocation3], %s272
        %s274 = smul.u32 16, %s23
        %p275 = scmp.lt.s32.totalorder %s274, 31
        %s276 = scalar_select %p275, %s274, 31
        %s277 = smul.addr %s276, 8
        %s278 = scalar_lea.vmem %s0, %s277
        %s279 = smul.u32 16, %s23
        %v280 = vld [vmem:[%s278] sm:$0xff]
        %v281 = vld [vmem:[%s278 + $0x8] sm:$0xff]
        %v282 = vld [vmem:[%s278 + $0x10] sm:$0xff]
        %v283 = vld [vmem:[%s278 + $0x18] sm:$0xff]
        %v284 = vld [vmem:[%s278 + $0x20] sm:$0xff]
        %v285 = vld [vmem:[%s278 + $0x28] sm:$0xff]
        %v286 = vld [vmem:[%s278 + $0x30] sm:$0xff]
        %v287 = vld [vmem:[%s278 + $0x38] sm:$0xff]
        %v288 = vld [vmem:[%s278 + $0x40] sm:$0xff]
        %v289 = vld [vmem:[%s278 + $0x48] sm:$0xff]
        %v290 = vld [vmem:[%s278 + $0x50] sm:$0xff]
        %v291 = vld [vmem:[%s278 + $0x58] sm:$0xff]
        %v292 = vld [vmem:[%s278 + $0x60] sm:$0xff]
        %v293 = vld [vmem:[%s278 + $0x68] sm:$0xff]
        %v294 = vld [vmem:[%s278 + $0x70] sm:$0xff]
        %v295 = vld [vmem:[%s278 + $0x78] sm:$0xff]
        %v296 = vld [vmem:[%s1] sm:$0xff]
        %v297 = vld [vmem:[%s1 + $0x8] sm:$0xff]
        %v298 = vld [vmem:[%s1 + $0x10] sm:$0xff]
        %v299 = vld [vmem:[%s1 + $0x18] sm:$0xff]
        %v300 = vld [vmem:[%s2] sm:$0xff]
        %v301 = vld [vmem:[%s2 + $0x8] sm:$0xff]
        %v302 = vld [vmem:[%s2 + $0x10] sm:$0xff]
        %v303 = vld [vmem:[%s2 + $0x18] sm:$0xff]
        %305 = vset.pattern.permute.xlu0 0
        %306 = vperm.xlu0 %305, %v300
        %v307 = vpop.permute.xlu0 %306
        %310 = vset.pattern.permute.xlu0 0
        %311 = vperm.xlu0 %310, %v301
        %v312 = vpop.permute.xlu0 %311
        %315 = vset.pattern.permute.xlu0 0
        %316 = vperm.xlu0 %315, %v302
        %v317 = vpop.permute.xlu0 %316
        %320 = vset.pattern.permute.xlu0 0
        %321 = vperm.xlu0 %320, %v303
        %v322 = vpop.permute.xlu0 %321
        %vm324 = vcmask 261120
        %v326 = vsel %vm324, %v296, 0
        %v329 = vsel %vm324, %v297, 0
        %v332 = vsel %vm324, %v298, 0
        %v335 = vsel %vm324, %v299, 0
        %v338 = vsel %vm324, %v280, 0
        %v341 = vsel %vm324, %v281, 0
        %v344 = vsel %vm324, %v282, 0
        %v347 = vsel %vm324, %v283, 0
        %v350 = vsel %vm324, %v284, 0
        %v353 = vsel %vm324, %v285, 0
        %v356 = vsel %vm324, %v286, 0
        %v359 = vsel %vm324, %v287, 0
        %v362 = vsel %vm324, %v288, 0
        %v365 = vsel %vm324, %v289, 0
        %v368 = vsel %vm324, %v290, 0
        %v371 = vsel %vm324, %v291, 0
        %v374 = vsel %vm324, %v292, 0
        %v377 = vsel %vm324, %v293, 0
        %v380 = vsel %vm324, %v294, 0
        %v383 = vsel %vm324, %v295, 0
        %385 = vmatprep.subr.mxu0 0.0
        %386 = vmatpush1.xpose.msra.mxu0 %v383
        %387 = vmatprep.subr.mxu0 0.0
        %388 = vmatpush1.xpose.msra.mxu0 %v380
        %389 = vmatprep.subr.mxu0 0.0
        %390 = vmatpush1.xpose.msra.mxu0 %v377
        %391 = vmatprep.subr.mxu0 0.0
        %392 = vmatpush1.xpose.msra.mxu0 %v374
        %393 = vmatprep.subr.mxu0 0.0
        %394 = vmatpush1.xpose.msra.mxu0 %v371
        %395 = vmatprep.subr.mxu0 0.0
        %396 = vmatpush1.xpose.msra.mxu0 %v368
        %397 = vmatprep.subr.mxu0 0.0
        %398 = vmatpush1.xpose.msra.mxu0 %v365
        %399 = vmatprep.subr.mxu0 0.0
        %400 = vmatpush1.xpose.msra.mxu0 %v362
        %401 = vmatprep.subr.mxu0 0.0
        %402 = vmatpush1.xpose.msra.mxu0 %v359
        %403 = vmatprep.subr.mxu0 0.0
        %404 = vmatpush1.xpose.msra.mxu0 %v356
        %405 = vmatprep.subr.mxu0 0.0
        %406 = vmatpush1.xpose.msra.mxu0 %v353
        %407 = vmatprep.subr.mxu0 0.0
        %408 = vmatpush1.xpose.msra.mxu0 %v350
        %409 = vmatprep.subr.mxu0 0.0
        %410 = vmatpush1.xpose.msra.mxu0 %v347
        %411 = vmatprep.subr.mxu0 0.0
        %412 = vmatpush1.xpose.msra.mxu0 %v344
        %413 = vmatprep.subr.mxu0 0.0
        %414 = vmatpush1.xpose.msra.mxu0 %v341
        %415 = vmatprep.subr.mxu0 0.0
        %416 = vmatpush1.xpose.msra.mxu0 %v338
        %417 = vmatprep.subr.mxu0 0.0
        %418 = vmatpush2.xpose.msra.mxu0 0.0
        %419 = vmatprep.subr.mxu0 0.0
        %420 = vmatpush2.xpose.msra.mxu0 0.0
        %421 = vmatprep.subr.mxu0 0.0
        %422 = vmatpush2.xpose.msra.mxu0 0.0
        %423 = vmatprep.subr.mxu0 0.0
        %424 = vmatpush2.xpose.msra.mxu0 0.0
        %425 = vmatprep.subr.mxu0 0.0
        %426 = vmatpush2.xpose.msra.mxu0 0.0
        %427 = vmatprep.subr.mxu0 0.0
        %428 = vmatpush2.xpose.msra.mxu0 0.0
        %429 = vmatprep.subr.mxu0 0.0
        %430 = vmatpush2.xpose.msra.mxu0 0.0
        %431 = vmatprep.subr.mxu0 0.0
        %432 = vmatpush2.xpose.msra.mxu0 0.0
        %433 = vmatprep.subr.mxu0 0.0
        %434 = vmatpush2.xpose.msra.mxu0 0.0
        %435 = vmatprep.subr.mxu0 0.0
        %436 = vmatpush2.xpose.msra.mxu0 0.0
        %437 = vmatprep.subr.mxu0 0.0
        %438 = vmatpush2.xpose.msra.mxu0 0.0
        %439 = vmatprep.subr.mxu0 0.0
        %440 = vmatpush2.xpose.msra.mxu0 0.0
        %441 = vmatprep.subr.mxu0 0.0
        %442 = vmatpush2.xpose.msra.mxu0 0.0
        %443 = vmatprep.subr.mxu0 0.0
        %444 = vmatpush2.xpose.msra.mxu0 0.0
        %445 = vmatprep.subr.mxu0 0.0
        %446 = vmatpush2.xpose.msra.mxu0 0.0
        %447 = vmatprep.subr.mxu0 0.0
        %448 = vmatpush2.xpose.msra.mxu0 0.0
        %449 = vmatprep.mubr.f32.mxu0 0.0
        %450 = vmatmul.mubr.f32.gmra.mxu0 %v326
        %v451 = vpop.f32.mrf.mxu0
        %v452 = vadd.f32 %v307, %v451
        %v453 = vpop.f32.mrf.mxu0
        %454 = vmatprep.mubr.f32.mxu0 0.0
        %455 = vmatmul.mubr.f32.gmra.mxu0 %v329
        %v456 = vpop.f32.mrf.mxu0
        %v457 = vadd.f32 %v312, %v456
        %v458 = vpop.f32.mrf.mxu0
        %459 = vmatprep.mubr.f32.mxu0 0.0
        %460 = vmatmul.mubr.f32.gmra.mxu0 %v332
        %v461 = vpop.f32.mrf.mxu0
        %v462 = vadd.f32 %v317, %v461
        %v463 = vpop.f32.mrf.mxu0
        %464 = vmatprep.mubr.f32.mxu0 0.0
        %465 = vmatmul.mubr.f32.gmra.mxu0 %v335
        %v466 = vpop.f32.mrf.mxu0
        %v467 = vadd.f32 %v322, %v466
        %v468 = vpop.f32.mrf.mxu0
        %469 = vdwg.mxu0
        %v470 = vmax.f32 %v452, 0.0
        %v471 = vmax.f32 %v457, 0.0
        %v472 = vmax.f32 %v462, 0.0
        %v473 = vmax.f32 %v467, 0.0
        %v474 = vld [vmem:[%s3] sm:$0xff]
        %v475 = vld [vmem:[%s3 + $0x8] sm:$0xff]
        %v476 = vld [vmem:[%s3 + $0x10] sm:$0xff]
        %v477 = vld [vmem:[%s3 + $0x18] sm:$0xff]
        %v478 = vld [vmem:[%s4] sm:$0xff]
        %v479 = vld [vmem:[%s4 + $0x8] sm:$0xff]
        %v480 = vld [vmem:[%s4 + $0x10] sm:$0xff]
        %v481 = vld [vmem:[%s4 + $0x18] sm:$0xff]
        %483 = vset.pattern.permute.xlu0 0
        %484 = vperm.xlu0 %483, %v478
        %v485 = vpop.permute.xlu0 %484
        %488 = vset.pattern.permute.xlu0 0
        %489 = vperm.xlu0 %488, %v479
        %v490 = vpop.permute.xlu0 %489
        %493 = vset.pattern.permute.xlu0 0
        %494 = vperm.xlu0 %493, %v480
        %v495 = vpop.permute.xlu0 %494
        %498 = vset.pattern.permute.xlu0 0
        %499 = vperm.xlu0 %498, %v481
        %v500 = vpop.permute.xlu0 %499
        %v503 = vsel %vm324, %v474, 0
        %v506 = vsel %vm324, %v475, 0
        %v509 = vsel %vm324, %v476, 0
        %v512 = vsel %vm324, %v477, 0
        %514 = vmatprep.subr.mxu0 0.0
        %515 = vmatpush1.msra.mxu0 0.0
        %516 = vmatprep.subr.mxu0 0.0
        %517 = vmatpush1.msra.mxu0 0.0
        %518 = vmatprep.subr.mxu0 0.0
        %519 = vmatpush1.msra.mxu0 0.0
        %520 = vmatprep.subr.mxu0 0.0
        %521 = vmatpush1.msra.mxu0 0.0
        %522 = vmatprep.subr.mxu0 0.0
        %523 = vmatpush1.msra.mxu0 0.0
        %524 = vmatprep.subr.mxu0 0.0
        %525 = vmatpush1.msra.mxu0 0.0
        %526 = vmatprep.subr.mxu0 0.0
        %527 = vmatpush1.msra.mxu0 0.0
        %528 = vmatprep.subr.mxu0 0.0
        %529 = vmatpush1.msra.mxu0 0.0
        %530 = vmatprep.subr.mxu0 0.0
        %531 = vmatpush1.msra.mxu0 0.0
        %532 = vmatprep.subr.mxu0 0.0
        %533 = vmatpush1.msra.mxu0 0.0
        %534 = vmatprep.subr.mxu0 0.0
        %535 = vmatpush1.msra.mxu0 0.0
        %536 = vmatprep.subr.mxu0 0.0
        %537 = vmatpush1.msra.mxu0 0.0
        %538 = vmatprep.subr.mxu0 0.0
        %539 = vmatpush1.msra.mxu0 %v473
        %540 = vmatprep.subr.mxu0 0.0
        %541 = vmatpush1.msra.mxu0 %v472
        %542 = vmatprep.subr.mxu0 0.0
        %543 = vmatpush1.msra.mxu0 %v471
        %544 = vmatprep.subr.mxu0 0.0
        %545 = vmatpush1.msra.mxu0 %v470
        %546 = vmatprep.subr.mxu0 0.0
        %547 = vmatpush2.msra.mxu0 0.0
        %548 = vmatprep.subr.mxu0 0.0
        %549 = vmatpush2.msra.mxu0 0.0
        %550 = vmatprep.subr.mxu0 0.0
        %551 = vmatpush2.msra.mxu0 0.0
        %552 = vmatprep.subr.mxu0 0.0
        %553 = vmatpush2.msra.mxu0 0.0
        %554 = vmatprep.subr.mxu0 0.0
        %555 = vmatpush2.msra.mxu0 0.0
        %556 = vmatprep.subr.mxu0 0.0
        %557 = vmatpush2.msra.mxu0 0.0
        %558 = vmatprep.subr.mxu0 0.0
        %559 = vmatpush2.msra.mxu0 0.0
        %560 = vmatprep.subr.mxu0 0.0
        %561 = vmatpush2.msra.mxu0 0.0
        %562 = vmatprep.subr.mxu0 0.0
        %563 = vmatpush2.msra.mxu0 0.0
        %564 = vmatprep.subr.mxu0 0.0
        %565 = vmatpush2.msra.mxu0 0.0
        %566 = vmatprep.subr.mxu0 0.0
        %567 = vmatpush2.msra.mxu0 0.0
        %568 = vmatprep.subr.mxu0 0.0
        %569 = vmatpush2.msra.mxu0 0.0
        %570 = vmatprep.subr.mxu0 0.0
        %571 = vmatpush2.msra.mxu0 0.0
        %572 = vmatprep.subr.mxu0 0.0
        %573 = vmatpush2.msra.mxu0 0.0
        %574 = vmatprep.subr.mxu0 0.0
        %575 = vmatpush2.msra.mxu0 0.0
        %576 = vmatprep.subr.mxu0 0.0
        %577 = vmatpush2.msra.mxu0 0.0
        %578 = vmatprep.mubr.f32.mxu0 0.0
        %579 = vmatmul.mubr.f32.gmra.mxu0 %v503
        %v580 = vpop.f32.mrf.mxu0
        %v581 = vadd.f32 %v485, %v580
        %v582 = vpop.f32.mrf.mxu0
        %583 = vmatprep.mubr.f32.mxu0 0.0
        %584 = vmatmul.mubr.f32.gmra.mxu0 %v506
        %v585 = vpop.f32.mrf.mxu0
        %v586 = vadd.f32 %v490, %v585
        %v587 = vpop.f32.mrf.mxu0
        %588 = vmatprep.mubr.f32.mxu0 0.0
        %589 = vmatmul.mubr.f32.gmra.mxu0 %v509
        %v590 = vpop.f32.mrf.mxu0
        %v591 = vadd.f32 %v495, %v590
        %v592 = vpop.f32.mrf.mxu0
        %593 = vmatprep.mubr.f32.mxu0 0.0
        %594 = vmatmul.mubr.f32.gmra.mxu0 %v512
        %v595 = vpop.f32.mrf.mxu0
        %v596 = vadd.f32 %v500, %v595
        %v597 = vpop.f32.mrf.mxu0
        %598 = vdwg.mxu0
        %v599 = vmax.f32 %v581, 0.0
        %v600 = vmax.f32 %v586, 0.0
        %v601 = vmax.f32 %v591, 0.0
        %v602 = vmax.f32 %v596, 0.0
        %v603 = vld [vmem:[%s5] sm:$0xff]
        %v604 = vld [vmem:[%s5 + $0x8] sm:$0xff]
        %v605 = vld [vmem:[%s5 + $0x10] sm:$0xff]
        %v606 = vld [vmem:[%s5 + $0x18] sm:$0xff]
        %608 = vset.pattern.permute.xlu0 0
        %609 = vperm.xlu0 %608, %v603
        %v610 = vpop.permute.xlu0 %609
        %613 = vset.pattern.permute.xlu0 0
        %614 = vperm.xlu0 %613, %v604
        %v615 = vpop.permute.xlu0 %614
        %618 = vset.pattern.permute.xlu0 0
        %619 = vperm.xlu0 %618, %v605
        %v620 = vpop.permute.xlu0 %619
        %623 = vset.pattern.permute.xlu0 0
        %624 = vperm.xlu0 %623, %v606
        %v625 = vpop.permute.xlu0 %624
        %v627 = vmul.f32 %v599, %v610
        %v628 = vmul.f32 %v600, %v615
        %v629 = vmul.f32 %v601, %v620
        %v630 = vmul.f32 %v602, %v625
        %v631 = vadd.f32 %v627, %v628
        %v632 = vadd.f32 %v631, %v629
        %v633 = vadd.f32 %v632, %v630
        %v634 = vrot.slane %v633, 4
        %v635 = vadd.f32 %v633, %v634
        %v636 = vrot.slane %v635, 2
        %v637 = vadd.f32 %v635, %v636
        %v638 = vrot.slane %v637, 1
        %v639 = vadd.f32 %v637, %v638
        %v640 = vld [vmem:[#allocation2] sm:$0x1]
        %642 = vset.pattern.permute.xlu0 0
        %643 = vperm.xlu0 %642, %v640
        %v644 = vpop.permute.xlu0 %643
        %v646 = vlaneseq
        %v647 = vshrl.u32 %v646, 7
        %v648 = vsub.s32 0, %v647
        %v649 = vrot.slane %v644, %v648
        %v650 = vadd.f32 %v639, %v649
        %651 = vst [vmem:[%s273] sm:$0x1] %v650
        %s652 = sand.u32 %s183, 1
        %s653 = scalar_lea.sflag [#allocation4], %s652
        %s654 = sand.u32 %s183, 1
        %s655 = scalar_lea.vmem [#allocation3], %s654
        // Predicated region
        $region49: #{tpu_custom_call.1} parent=47 // pred_check
          %p656 = pneg %p193
        $region50: #{tpu_custom_call.1} parent=47 // pred_check_branch
          %658 = sbr.rel (%p656) target = $region52
        $region51: #{tpu_custom_call.1} parent=47 // pred_region
          %s660 = ssub.s32 16, 16
          %661 = vsyncadd %s653, %s660
          %s662 = smul.addr %s23, 16
          %s663 = scalar_lea.hbm %s7, %s662
          %s665 = sshll.u32 %s655, 4
          %s666 = int_to_ptr.vmem [resolvable:$true] %s665
          %668 = dma.vmem_to_hbm [thread:$0]  %s666, 16, %s663, %s653
        $region52: #{tpu_custom_call.1} parent=47 // pred_fallthru
          _
      $region48: #{tpu_custom_call.1} parent=5 // pred_fallthru
        _
      %p669 = scmp.le.s32.totalorder 2, %s18
      // Predicated region
      $region53: #{tpu_custom_call.1} parent=5 // pred_check
        %p670 = pneg %p669
      $region54: #{tpu_custom_call.1} parent=5 // pred_check_branch
        %672 = sbr.rel (%p670) target = $region56
      $region55: #{tpu_custom_call.1} parent=5 // pred_region
        %s673 = ssub.s32 %s18, 2
        // Predicated region
        $region57: #{tpu_custom_call.1} parent=55 // pred_check
          %p674 = pneg %p199
        $region58: #{tpu_custom_call.1} parent=55 // pred_check_branch
          %676 = sbr.rel (%p674) target = $region60
        $region59: #{tpu_custom_call.1} parent=55 // pred_region
          %s677 = sand.u32 %s184, 1
          %s678 = scalar_lea.sflag [#allocation4], %s677
          %s679 = sand.u32 %s184, 1
          %s680 = scalar_lea.vmem [#allocation3], %s679
          %681 = dma.done %s678, 16
        $region60: #{tpu_custom_call.1} parent=55 // pred_fallthru
          _
      $region56: #{tpu_custom_call.1} parent=5 // pred_fallthru
        _
    $region6: #{tpu_custom_call.1} parent=1 // loop_footer
      %s22 = sadd.s32 1, %s18
    $region7: #{tpu_custom_call.1} parent=1 // loop_footer_branch
      %17 = sbr.rel target = $region3
    $region8: #{tpu_custom_call.1} parent=1 // loop_exit
      _
    %682 = vsyncpa [#allocation4], 1
    %s683 = scalar_lea.sflag [#allocation4], 1
    %684 = vsyncpa %s683, 1

</llo_original>
